<compile_context>
chip_gen: v5e
topology: v5e:2x2
jax: 0.10.0
libtpu: 0.0.40
codegen_flags: <defaults>
</compile_context>

<pallas_src>
import jax
import jax.numpy as jnp
from jax.experimental import pallas as pl
from jax.experimental.pallas import tpu as pltpu

_OUT_PAD = 128   # lane-dense padded logits width (true width is 10)
_MAX_TILE_B = 1024


def _round_up(n, m):
    return ((n + m - 1) // m) * m


def _mlp_kernel(x_ref,
                w1_ref, b1_ref,
                w2_ref, b2_ref,
                w3_ref, b3_ref,
                w4_ref, b4_ref,
                o_ref):
    # Fused affine chain (the reference module has no ReLU/softmax).
    # x / weights are bf16; every dot accumulates in f32; biases are f32.
    x = x_ref[...]                                                   # bf16
    h = jnp.dot(x, w1_ref[...],
                preferred_element_type=jnp.float32) + b1_ref[...]    # f32
    h = jnp.dot(h, w2_ref[...],
                preferred_element_type=jnp.float32) + b2_ref[...]
    h = jnp.dot(h, w3_ref[...],
                preferred_element_type=jnp.float32) + b3_ref[...]
    h = jnp.dot(h, w4_ref[...],
                preferred_element_type=jnp.float32) + b4_ref[...]
    o_ref[...] = h.astype(o_ref.dtype)


def mlp_forward(x, params, *, tile_b=_MAX_TILE_B):
    """x: (B, 784). params: w1..w4 stored (in, out) bf16, b1..b4 (1, out) f32.

    Returns (B, 10) float32 logits.
    """
    B, K = x.shape
    n_out = params["w4"].shape[1]

    # Cast x once (no-op if the caller already supplies bf16; under jit this
    # fuses with whatever produced x).
    x = x.astype(jnp.bfloat16)
    w1, b1 = params["w1"], params["b1"]
    w2, b2 = params["w2"], params["b2"]
    w3, b3 = params["w3"], params["b3"]
    w4, b4 = params["w4"], params["b4"]

    # Zero-pad the last layer to 128 output lanes -> unmasked full-lane stores.
    w4p = jnp.zeros((w4.shape[0], _OUT_PAD), w4.dtype).at[:, :n_out].set(w4)
    b4p = jnp.zeros((1, _OUT_PAD), b4.dtype).at[:, :n_out].set(b4)

    tb = min(tile_b, _round_up(B, 8))           # sublane-aligned batch tile
    grid = (pl.cdiv(B, tb),)

    def resident(a):                             # constant block -> stays in VMEM
        return pl.BlockSpec(a.shape, lambda i, _a=a: tuple(0 for _ in _a.shape))

    out_shape = jax.ShapeDtypeStruct((B, _OUT_PAD), jnp.float32)

    out = pl.pallas_call(
        _mlp_kernel,
        out_shape=out_shape,
        grid=grid,
        in_specs=[pl.BlockSpec((tb, K), lambda i: (i, 0)),
                  resident(w1), resident(b1),
                  resident(w2), resident(b2),
                  resident(w3), resident(b3),
                  resident(w4p), resident(b4p)],
        out_specs=pl.BlockSpec((tb, _OUT_PAD), lambda i: (i, 0)),
        compiler_params=pltpu.CompilerParams(
            dimension_semantics=("parallel",)),
    )(x, w1, b1, w2, b2, w3, b3, w4p, b4p)

    return out[:, :n_out]


def init_params(key):
    """Deterministic init mirroring nn.Linear default (uniform +/- 1/sqrt(fan_in)).

    Weights stored as (in, out) bf16 (kernel computes x @ W = x @ W_pt.T);
    biases stored (1, out) f32.
    """
    dims = [(784, 64), (64, 32), (32, 10), (10, 10)]
    params = {}
    for i, (fan_in, fan_out) in enumerate(dims, start=1):
        key, kw, kb = jax.random.split(key, 3)
        bound = 1.0 / jnp.sqrt(jnp.float32(fan_in))
        params[f"w{i}"] = jax.random.uniform(
            kw, (fan_in, fan_out), jnp.float32, -bound, bound).astype(jnp.bfloat16)
        params[f"b{i}"] = jax.random.uniform(
            kb, (1, fan_out), jnp.float32, -bound, bound)
    return params


def reference_forward(x, params):
    """Pure-JAX reference using the same bf16-quantized operands."""
    h = x.astype(jnp.bfloat16).astype(jnp.float32)
    for i in range(1, 5):
        w = params[f"w{i}"].astype(jnp.float32)
        b = params[f"b{i}"].astype(jnp.float32)
        h = h @ w + b
    return h


if __name__ == "__main__":
    key = jax.random.PRNGKey(0)
    key, kx = jax.random.split(key)
    B = 8
    x = jax.random.normal(kx, (B, 784), jnp.float32)
    params = init_params(key)

    out = mlp_forward(x, params)
    out = jax.block_until_ready(out)

    ref = reference_forward(x, params)
    assert out.shape == (B, 10)
    assert jnp.allclose(out, ref, atol=5e-3, rtol=5e-2), "mismatch vs JAX reference"
    print("KERNEL_OK")
</pallas_src>

<mosaic_0001>
module attributes {stable_mosaic.version = 11 : i64} {
  func.func @_mlp_kernel(%arg0: i32, %arg1: memref<8x784xbf16, #tpu.memory_space<vmem>>, %arg2: memref<784x64xbf16, #tpu.memory_space<vmem>>, %arg3: memref<1x64xf32, #tpu.memory_space<vmem>>, %arg4: memref<64x32xbf16, #tpu.memory_space<vmem>>, %arg5: memref<1x32xf32, #tpu.memory_space<vmem>>, %arg6: memref<32x10xbf16, #tpu.memory_space<vmem>>, %arg7: memref<1x10xf32, #tpu.memory_space<vmem>>, %arg8: memref<10x128xbf16, #tpu.memory_space<vmem>>, %arg9: memref<1x128xf32, #tpu.memory_space<vmem>>, %arg10: memref<8x128xf32, #tpu.memory_space<vmem>>) attributes {dimension_semantics = [#tpu.dimension_semantics<parallel>], iteration_bounds = array<i64: 1>, scalar_prefetch = 0 : i64, scratch_operands = 0 : i64, tpu.core_type = #tpu.core_type<tc>, window_params = [{transform_indices = @transform_0, window_bounds = array<i64: 8, 784>}, {pipeline_mode = #tpu.pipeline_mode<synchronous>, transform_indices = @transform_1, window_bounds = array<i64: 784, 64>}, {pipeline_mode = #tpu.pipeline_mode<synchronous>, transform_indices = @transform_2, window_bounds = array<i64: 1, 64>}, {pipeline_mode = #tpu.pipeline_mode<synchronous>, transform_indices = @transform_3, window_bounds = array<i64: 64, 32>}, {pipeline_mode = #tpu.pipeline_mode<synchronous>, transform_indices = @transform_4, window_bounds = array<i64: 1, 32>}, {pipeline_mode = #tpu.pipeline_mode<synchronous>, transform_indices = @transform_5, window_bounds = array<i64: 32, 10>}, {pipeline_mode = #tpu.pipeline_mode<synchronous>, transform_indices = @transform_6, window_bounds = array<i64: 1, 10>}, {pipeline_mode = #tpu.pipeline_mode<synchronous>, transform_indices = @transform_7, window_bounds = array<i64: 10, 128>}, {pipeline_mode = #tpu.pipeline_mode<synchronous>, transform_indices = @transform_8, window_bounds = array<i64: 1, 128>}, {transform_indices = @transform_9, window_bounds = array<i64: 8, 128>}]} {
    %c0 = arith.constant 0 : index
    %c0_0 = arith.constant 0 : index
    %0 = vector.load %arg1[%c0, %c0_0] : memref<8x784xbf16, #tpu.memory_space<vmem>>, vector<8x784xbf16>
    %c0_1 = arith.constant 0 : index
    %c0_2 = arith.constant 0 : index
    %1 = vector.load %arg2[%c0_1, %c0_2] : memref<784x64xbf16, #tpu.memory_space<vmem>>, vector<784x64xbf16>
    %cst = arith.constant dense<0.000000e+00> : vector<8x64xf32>
    %2 = tpu.matmul %0, %1, %cst {dimension_numbers = #tpu.dot_dimension_numbers<[1], [0], [0], [1], [0, 0, 1, 1], [], []>} : vector<8x784xbf16>, vector<784x64xbf16>, vector<8x64xf32> -> vector<8x64xf32>
    %c0_3 = arith.constant 0 : index
    %c0_4 = arith.constant 0 : index
    %3 = vector.load %arg3[%c0_3, %c0_4] : memref<1x64xf32, #tpu.memory_space<vmem>>, vector<1x64xf32>
    %4 = vector.broadcast %3 : vector<1x64xf32> to vector<8x64xf32>
    %5 = arith.addf %2, %4 : vector<8x64xf32>
    %c0_5 = arith.constant 0 : index
    %c0_6 = arith.constant 0 : index
    %6 = vector.load %arg4[%c0_5, %c0_6] : memref<64x32xbf16, #tpu.memory_space<vmem>>, vector<64x32xbf16>
    %cst_7 = arith.constant dense<0.000000e+00> : vector<8x32xf32>
    %7 = tpu.matmul %5, %6, %cst_7 {dimension_numbers = #tpu.dot_dimension_numbers<[1], [0], [0], [1], [0, 0, 1, 1], [], []>} : vector<8x64xf32>, vector<64x32xbf16>, vector<8x32xf32> -> vector<8x32xf32>
    %c0_8 = arith.constant 0 : index
    %c0_9 = arith.constant 0 : index
    %8 = vector.load %arg5[%c0_8, %c0_9] : memref<1x32xf32, #tpu.memory_space<vmem>>, vector<1x32xf32>
    %9 = vector.broadcast %8 : vector<1x32xf32> to vector<8x32xf32>
    %10 = arith.addf %7, %9 : vector<8x32xf32>
    %c0_10 = arith.constant 0 : index
    %c0_11 = arith.constant 0 : index
    %11 = vector.load %arg6[%c0_10, %c0_11] : memref<32x10xbf16, #tpu.memory_space<vmem>>, vector<32x10xbf16>
    %cst_12 = arith.constant dense<0.000000e+00> : vector<8x10xf32>
    %12 = tpu.matmul %10, %11, %cst_12 {dimension_numbers = #tpu.dot_dimension_numbers<[1], [0], [0], [1], [0, 0, 1, 1], [], []>} : vector<8x32xf32>, vector<32x10xbf16>, vector<8x10xf32> -> vector<8x10xf32>
    %c0_13 = arith.constant 0 : index
    %c0_14 = arith.constant 0 : index
    %13 = vector.load %arg7[%c0_13, %c0_14] : memref<1x10xf32, #tpu.memory_space<vmem>>, vector<1x10xf32>
    %14 = vector.broadcast %13 : vector<1x10xf32> to vector<8x10xf32>
    %15 = arith.addf %12, %14 : vector<8x10xf32>
    %c0_15 = arith.constant 0 : index
    %c0_16 = arith.constant 0 : index
    %16 = vector.load %arg8[%c0_15, %c0_16] : memref<10x128xbf16, #tpu.memory_space<vmem>>, vector<10x128xbf16>
    %cst_17 = arith.constant dense<0.000000e+00> : vector<8x128xf32>
    %17 = tpu.matmul %15, %16, %cst_17 {dimension_numbers = #tpu.dot_dimension_numbers<[1], [0], [0], [1], [0, 0, 1, 1], [], []>} : vector<8x10xf32>, vector<10x128xbf16>, vector<8x128xf32> -> vector<8x128xf32>
    %c0_18 = arith.constant 0 : index
    %c0_19 = arith.constant 0 : index
    %18 = vector.load %arg9[%c0_18, %c0_19] : memref<1x128xf32, #tpu.memory_space<vmem>>, vector<1x128xf32>
    %19 = vector.broadcast %18 : vector<1x128xf32> to vector<8x128xf32>
    %20 = arith.addf %17, %19 : vector<8x128xf32>
    %c0_20 = arith.constant 0 : index
    %c0_21 = arith.constant 0 : index
    %21 = vector.load %arg10[%c0_20, %c0_21] : memref<8x128xf32, #tpu.memory_space<vmem>>, vector<8x128xf32>
    tpu.vector_store %arg10[%c0_20, %c0_21], %20 {strides = array<i32>} : memref<8x128xf32, #tpu.memory_space<vmem>>, vector<8x128xf32>,
    return
  }
  func.func @transform_0(%arg0: i32) -> (i32, i32) {
    %c0_i32 = arith.constant 0 : i32
    %c0_i32_0 = arith.constant 0 : i32
    return %arg0, %c0_i32 : i32, i32
  }
  func.func @transform_1(%arg0: i32) -> (i32, i32) {
    %c0_i32 = arith.constant 0 : i32
    %c0_i32_0 = arith.constant 0 : i32
    %c0_i32_1 = arith.constant 0 : i32
    return %c0_i32, %c0_i32_0 : i32, i32
  }
  func.func @transform_2(%arg0: i32) -> (i32, i32) {
    %c0_i32 = arith.constant 0 : i32
    %c0_i32_0 = arith.constant 0 : i32
    %c0_i32_1 = arith.constant 0 : i32
    return %c0_i32, %c0_i32_0 : i32, i32
  }
  func.func @transform_3(%arg0: i32) -> (i32, i32) {
    %c0_i32 = arith.constant 0 : i32
    %c0_i32_0 = arith.constant 0 : i32
    %c0_i32_1 = arith.constant 0 : i32
    return %c0_i32, %c0_i32_0 : i32, i32
  }
  func.func @transform_4(%arg0: i32) -> (i32, i32) {
    %c0_i32 = arith.constant 0 : i32
    %c0_i32_0 = arith.constant 0 : i32
    %c0_i32_1 = arith.constant 0 : i32
    return %c0_i32, %c0_i32_0 : i32, i32
  }
  func.func @transform_5(%arg0: i32) -> (i32, i32) {
    %c0_i32 = arith.constant 0 : i32
    %c0_i32_0 = arith.constant 0 : i32
    %c0_i32_1 = arith.constant 0 : i32
    return %c0_i32, %c0_i32_0 : i32, i32
  }
  func.func @transform_6(%arg0: i32) -> (i32, i32) {
    %c0_i32 = arith.constant 0 : i32
    %c0_i32_0 = arith.constant 0 : i32
    %c0_i32_1 = arith.constant 0 : i32
    return %c0_i32, %c0_i32_0 : i32, i32
  }
  func.func @transform_7(%arg0: i32) -> (i32, i32) {
    %c0_i32 = arith.constant 0 : i32
    %c0_i32_0 = arith.constant 0 : i32
    %c0_i32_1 = arith.constant 0 : i32
    return %c0_i32, %c0_i32_0 : i32, i32
  }
  func.func @transform_8(%arg0: i32) -> (i32, i32) {
    %c0_i32 = arith.constant 0 : i32
    %c0_i32_0 = arith.constant 0 : i32
    %c0_i32_1 = arith.constant 0 : i32
    return %c0_i32, %c0_i32_0 : i32, i32
  }
  func.func @transform_9(%arg0: i32) -> (i32, i32) {
    %c0_i32 = arith.constant 0 : i32
    %c0_i32_0 = arith.constant 0 : i32
    return %arg0, %c0_i32 : i32, i32
  }
}

</mosaic_0001>

<llo_original>
// kernel: tpu_custom_call.1
$region0: #{tpu_custom_call.1}
  #allocation0 [shape = 'u32[]', space=smem, size = 0x4, offset = 0x4, fixed_abs, tag = 'smem constant byte address 0x4 - core index']
  #allocation1 [shape = 'u32[72,128]{1,0:T(1,128)}', space=vmem, size = 0x9000, scoped, tag = 'internal scratch']
  %s0 = inlined_call_operand.vmem [shape: bf16[8,784], index: 0, kind: input, shape index: {}]
  %s1 = inlined_call_operand.vmem [shape: bf16[784,64], index: 1, kind: input, shape index: {}]
  %s2 = inlined_call_operand.vmem [shape: f32[1,64], index: 2, kind: input, shape index: {}]
  %s3 = inlined_call_operand.vmem [shape: bf16[64,32], index: 3, kind: input, shape index: {}]
  %s4 = inlined_call_operand.vmem [shape: f32[1,32], index: 4, kind: input, shape index: {}]
  %s5 = inlined_call_operand.vmem [shape: bf16[32,10], index: 5, kind: input, shape index: {}]
  %s6 = inlined_call_operand.vmem [shape: f32[1,10], index: 6, kind: input, shape index: {}]
  %s7 = inlined_call_operand.vmem [shape: bf16[10,128], index: 7, kind: input, shape index: {}]
  %s8 = inlined_call_operand.vmem [shape: f32[1,128], index: 8, kind: input, shape index: {}]
  %s9 = inlined_call_operand.hbm [shape: f32[8,128], index: 9, kind: output, shape index: {}]
  %s10 = sld [smem:[#allocation0]]
  $region46: #{tpu_custom_call.1} parent=0
    _
  %s12 = ssub.s32 1, %s10
  %s13 = scalar_select 0, %s12, %s10
  $region1: #{tpu_custom_call.1} parent=0
    #allocation2 [shape = 'u8[4096]{0}', space=vmem, size = 0x1000, scoped, tag = 'output window, operand 0, single buffered']
    #allocation3 [shape = 's32[1]{0}', space=sflag, size = 0x4, scoped, tag = 'scoped memory for tpu_custom_call.1']
    %14 = vsyncpa [#allocation3], 0
    // Predicated region
    $region2: #{tpu_custom_call.1} parent=1 // pred_check
      _
    $region3: #{tpu_custom_call.1} parent=1 // pred_check_branch
      %16 = sbr.rel (0) target = $region5
    $region4: #{tpu_custom_call.1} parent=1 // pred_region
      _
    $region5: #{tpu_custom_call.1} parent=1 // pred_fallthru
      _
    // Predicated region
    $region6: #{tpu_custom_call.1} parent=1 // pred_check
      _
    $region7: #{tpu_custom_call.1} parent=1 // pred_check_branch
      %18 = sbr.rel (0) target = $region9
    $region8: #{tpu_custom_call.1} parent=1 // pred_region
      _
    $region9: #{tpu_custom_call.1} parent=1 // pred_fallthru
      _
    // Predicated region
    $region10: #{tpu_custom_call.1} parent=1 // pred_check
      _
    $region11: #{tpu_custom_call.1} parent=1 // pred_check_branch
      %20 = sbr.rel (0) target = $region13
    $region12: #{tpu_custom_call.1} parent=1 // pred_region
      _
    $region13: #{tpu_custom_call.1} parent=1 // pred_fallthru
      _
    // Predicated region
    $region14: #{tpu_custom_call.1} parent=1 // pred_check
      _
    $region15: #{tpu_custom_call.1} parent=1 // pred_check_branch
      %22 = sbr.rel (0) target = $region17
    $region16: #{tpu_custom_call.1} parent=1 // pred_region
      _
    $region17: #{tpu_custom_call.1} parent=1 // pred_fallthru
      _
    // Predicated region
    $region18: #{tpu_custom_call.1} parent=1 // pred_check
      _
    $region19: #{tpu_custom_call.1} parent=1 // pred_check_branch
      %24 = sbr.rel (0) target = $region21
    $region20: #{tpu_custom_call.1} parent=1 // pred_region
      _
    $region21: #{tpu_custom_call.1} parent=1 // pred_fallthru
      _
    // Predicated region
    $region22: #{tpu_custom_call.1} parent=1 // pred_check
      _
    $region23: #{tpu_custom_call.1} parent=1 // pred_check_branch
      %26 = sbr.rel (0) target = $region25
    $region24: #{tpu_custom_call.1} parent=1 // pred_region
      _
    $region25: #{tpu_custom_call.1} parent=1 // pred_fallthru
      _
    // Predicated region
    $region26: #{tpu_custom_call.1} parent=1 // pred_check
      _
    $region27: #{tpu_custom_call.1} parent=1 // pred_check_branch
      %28 = sbr.rel (0) target = $region29
    $region28: #{tpu_custom_call.1} parent=1 // pred_region
      _
    $region29: #{tpu_custom_call.1} parent=1 // pred_fallthru
      _
    // Predicated region
    $region30: #{tpu_custom_call.1} parent=1 // pred_check
      _
    $region31: #{tpu_custom_call.1} parent=1 // pred_check_branch
      %30 = sbr.rel (0) target = $region33
    $region32: #{tpu_custom_call.1} parent=1 // pred_region
      _
    $region33: #{tpu_custom_call.1} parent=1 // pred_fallthru
      _
    // Predicated region
    $region34: #{tpu_custom_call.1} parent=1 // pred_check
      _
    $region35: #{tpu_custom_call.1} parent=1 // pred_check_branch
      %32 = sbr.rel (0) target = $region37
    $region36: #{tpu_custom_call.1} parent=1 // pred_region
      _
    $region37: #{tpu_custom_call.1} parent=1 // pred_fallthru
      _
    %v34 = vld [vmem:[%s0] sm:$0xff]
    %v35 = vld [vmem:[%s0 + $0x8] sm:$0xff]
    %v36 = vld [vmem:[%s0 + $0x10] sm:$0xff]
    %v37 = vld [vmem:[%s0 + $0x18] sm:$0xf]
    %v38 = vld [vmem:[%s1] sm:$0xf]
    %v39 = vld [vmem:[%s1 + $0x4] sm:$0xf]
    %v40 = vld [vmem:[%s1 + $0x8] sm:$0xf]
    %v41 = vld [vmem:[%s1 + $0xc] sm:$0xf]
    %v42 = vld [vmem:[%s1 + $0x10] sm:$0xf]
    %v43 = vld [vmem:[%s1 + $0x14] sm:$0xf]
    %v44 = vld [vmem:[%s1 + $0x18] sm:$0xf]
    %v45 = vld [vmem:[%s1 + $0x1c] sm:$0xf]
    %v46 = vld [vmem:[%s1 + $0x20] sm:$0xf]
    %v47 = vld [vmem:[%s1 + $0x24] sm:$0xf]
    %v48 = vld [vmem:[%s1 + $0x28] sm:$0xf]
    %v49 = vld [vmem:[%s1 + $0x2c] sm:$0xf]
    %v50 = vld [vmem:[%s1 + $0x30] sm:$0xf]
    %v51 = vld [vmem:[%s1 + $0x34] sm:$0xf]
    %v52 = vld [vmem:[%s1 + $0x38] sm:$0xf]
    %v53 = vld [vmem:[%s1 + $0x3c] sm:$0xf]
    %v54 = vld [vmem:[%s1 + $0x40] sm:$0xf]
    %v55 = vld [vmem:[%s1 + $0x44] sm:$0xf]
    %v56 = vld [vmem:[%s1 + $0x48] sm:$0xf]
    %v57 = vld [vmem:[%s1 + $0x4c] sm:$0xf]
    %v58 = vld [vmem:[%s1 + $0x50] sm:$0xf]
    %v59 = vld [vmem:[%s1 + $0x54] sm:$0xf]
    %v60 = vld [vmem:[%s1 + $0x58] sm:$0xf]
    %v61 = vld [vmem:[%s1 + $0x5c] sm:$0xf]
    %v62 = vld [vmem:[%s1 + $0x60] sm:$0xf]
    %v63 = vld [vmem:[%s1 + $0x64] sm:$0xf]
    %v64 = vld [vmem:[%s1 + $0x68] sm:$0xf]
    %v65 = vld [vmem:[%s1 + $0x6c] sm:$0xf]
    %v66 = vld [vmem:[%s1 + $0x70] sm:$0xf]
    %v67 = vld [vmem:[%s1 + $0x74] sm:$0xf]
    %v68 = vld [vmem:[%s1 + $0x78] sm:$0xf]
    %v69 = vld [vmem:[%s1 + $0x7c] sm:$0xf]
    %v70 = vld [vmem:[%s1 + $0x80] sm:$0xf]
    %v71 = vld [vmem:[%s1 + $0x84] sm:$0xf]
    %v72 = vld [vmem:[%s1 + $0x88] sm:$0xf]
    %v73 = vld [vmem:[%s1 + $0x8c] sm:$0xf]
    %v74 = vld [vmem:[%s1 + $0x90] sm:$0xf]
    %v75 = vld [vmem:[%s1 + $0x94] sm:$0xf]
    %v76 = vld [vmem:[%s1 + $0x98] sm:$0xf]
    %v77 = vld [vmem:[%s1 + $0x9c] sm:$0xf]
    %v78 = vld [vmem:[%s1 + $0xa0] sm:$0xf]
    %v79 = vld [vmem:[%s1 + $0xa4] sm:$0xf]
    %v80 = vld [vmem:[%s1 + $0xa8] sm:$0xf]
    %v81 = vld [vmem:[%s1 + $0xac] sm:$0xf]
    %v82 = vld [vmem:[%s1 + $0xb0] sm:$0xf]
    %v83 = vld [vmem:[%s1 + $0xb4] sm:$0xf]
    %v84 = vld [vmem:[%s1 + $0xb8] sm:$0xf]
    %v85 = vld [vmem:[%s1 + $0xbc] sm:$0xf]
    %v86 = vld [vmem:[%s1 + $0xc0] sm:$0xf]
    %v87 = vld [vmem:[%s1 + $0xc4] sm:$0xf]
    %v88 = vld [vmem:[%s1 + $0xc8] sm:$0xf]
    %v89 = vld [vmem:[%s1 + $0xcc] sm:$0xf]
    %v90 = vld [vmem:[%s1 + $0xd0] sm:$0xf]
    %v91 = vld [vmem:[%s1 + $0xd4] sm:$0xf]
    %v92 = vld [vmem:[%s1 + $0xd8] sm:$0xf]
    %v93 = vld [vmem:[%s1 + $0xdc] sm:$0xf]
    %v94 = vld [vmem:[%s1 + $0xe0] sm:$0xf]
    %v95 = vld [vmem:[%s1 + $0xe4] sm:$0xf]
    %v96 = vld [vmem:[%s1 + $0xe8] sm:$0xf]
    %v97 = vld [vmem:[%s1 + $0xec] sm:$0xf]
    %v98 = vld [vmem:[%s1 + $0xf0] sm:$0xf]
    %v99 = vld [vmem:[%s1 + $0xf4] sm:$0xf]
    %v100 = vld [vmem:[%s1 + $0xf8] sm:$0xf]
    %v101 = vld [vmem:[%s1 + $0xfc] sm:$0xf]
    %v102 = vld [vmem:[%s1 + $0x100] sm:$0xf]
    %v103 = vld [vmem:[%s1 + $0x104] sm:$0xf]
    %v104 = vld [vmem:[%s1 + $0x108] sm:$0xf]
    %v105 = vld [vmem:[%s1 + $0x10c] sm:$0xf]
    %v106 = vld [vmem:[%s1 + $0x110] sm:$0xf]
    %v107 = vld [vmem:[%s1 + $0x114] sm:$0xf]
    %v108 = vld [vmem:[%s1 + $0x118] sm:$0xf]
    %v109 = vld [vmem:[%s1 + $0x11c] sm:$0xf]
    %v110 = vld [vmem:[%s1 + $0x120] sm:$0xf]
    %v111 = vld [vmem:[%s1 + $0x124] sm:$0xf]
    %v112 = vld [vmem:[%s1 + $0x128] sm:$0xf]
    %v113 = vld [vmem:[%s1 + $0x12c] sm:$0xf]
    %v114 = vld [vmem:[%s1 + $0x130] sm:$0xf]
    %v115 = vld [vmem:[%s1 + $0x134] sm:$0xf]
    %v116 = vld [vmem:[%s1 + $0x138] sm:$0xf]
    %v117 = vld [vmem:[%s1 + $0x13c] sm:$0xf]
    %v118 = vld [vmem:[%s1 + $0x140] sm:$0xf]
    %v119 = vld [vmem:[%s1 + $0x144] sm:$0xf]
    %v120 = vld [vmem:[%s1 + $0x148] sm:$0xf]
    %v121 = vld [vmem:[%s1 + $0x14c] sm:$0xf]
    %v122 = vld [vmem:[%s1 + $0x150] sm:$0xf]
    %v123 = vld [vmem:[%s1 + $0x154] sm:$0xf]
    %v124 = vld [vmem:[%s1 + $0x158] sm:$0xf]
    %v125 = vld [vmem:[%s1 + $0x15c] sm:$0xf]
    %v126 = vld [vmem:[%s1 + $0x160] sm:$0xf]
    %v127 = vld [vmem:[%s1 + $0x164] sm:$0xf]
    %v128 = vld [vmem:[%s1 + $0x168] sm:$0xf]
    %v129 = vld [vmem:[%s1 + $0x16c] sm:$0xf]
    %v130 = vld [vmem:[%s1 + $0x170] sm:$0xf]
    %v131 = vld [vmem:[%s1 + $0x174] sm:$0xf]
    %v132 = vld [vmem:[%s1 + $0x178] sm:$0xf]
    %v133 = vld [vmem:[%s1 + $0x17c] sm:$0xf]
    %v134 = vld [vmem:[%s1 + $0x180] sm:$0xf]
    %v135 = vld [vmem:[%s1 + $0x184] sm:$0xf]
    %v136 = vld [vmem:[%s2] sm:$0x1]
    %v138 = vperm.slane %v136, 0
    %v144 = vunpack.c.l.b16 %v34
    %v145 = vunpack.c.h.b16 %v34
    %v146 = vunpack.c.l.b16 %v35
    %v147 = vunpack.c.h.b16 %v35
    %v148 = vunpack.c.l.b16 %v36
    %v149 = vunpack.c.h.b16 %v36
    %v150 = vunpack.c.l.b16 %v37
    %v151 = vpack.c.b16 %v144, %v144
    %v152 = vpack.c.b16 %v145, %v145
    %v153 = vpack.c.b16 %v146, %v146
    %v154 = vpack.c.b16 %v147, %v147
    %v155 = vpack.c.b16 %v148, %v148
    %v156 = vpack.c.b16 %v149, %v149
    %v157 = vpack.c.b16 %v150, %v150
    %v262 = vunpack.c.l.b16 %v38
    %v263 = vunpack.c.l.b16 %v39
    %v264 = vunpack.c.l.b16 %v40
    %v265 = vunpack.c.l.b16 %v41
    %v266 = vunpack.c.l.b16 %v42
    %v267 = vunpack.c.l.b16 %v43
    %v268 = vunpack.c.l.b16 %v44
    %v269 = vunpack.c.l.b16 %v45
    %v270 = vunpack.c.l.b16 %v46
    %v271 = vunpack.c.l.b16 %v47
    %v272 = vunpack.c.l.b16 %v48
    %v273 = vunpack.c.l.b16 %v49
    %v274 = vunpack.c.l.b16 %v50
    %v275 = vunpack.c.l.b16 %v51
    %v276 = vunpack.c.l.b16 %v52
    %v277 = vunpack.c.l.b16 %v53
    %v278 = vunpack.c.l.b16 %v54
    %v279 = vunpack.c.l.b16 %v55
    %v280 = vunpack.c.l.b16 %v56
    %v281 = vunpack.c.l.b16 %v57
    %v282 = vunpack.c.l.b16 %v58
    %v283 = vunpack.c.l.b16 %v59
    %v284 = vunpack.c.l.b16 %v60
    %v285 = vunpack.c.l.b16 %v61
    %v286 = vunpack.c.l.b16 %v62
    %v287 = vunpack.c.l.b16 %v63
    %v288 = vunpack.c.l.b16 %v64
    %v289 = vunpack.c.l.b16 %v65
    %v290 = vunpack.c.l.b16 %v66
    %v291 = vunpack.c.l.b16 %v67
    %v292 = vunpack.c.l.b16 %v68
    %v293 = vunpack.c.l.b16 %v69
    %v294 = vunpack.c.l.b16 %v70
    %v295 = vunpack.c.l.b16 %v71
    %v296 = vunpack.c.l.b16 %v72
    %v297 = vunpack.c.l.b16 %v73
    %v298 = vunpack.c.l.b16 %v74
    %v299 = vunpack.c.l.b16 %v75
    %v300 = vunpack.c.l.b16 %v76
    %v301 = vunpack.c.l.b16 %v77
    %v302 = vunpack.c.l.b16 %v78
    %v303 = vunpack.c.l.b16 %v79
    %v304 = vunpack.c.l.b16 %v80
    %v305 = vunpack.c.l.b16 %v81
    %v306 = vunpack.c.l.b16 %v82
    %v307 = vunpack.c.l.b16 %v83
    %v308 = vunpack.c.l.b16 %v84
    %v309 = vunpack.c.l.b16 %v85
    %v310 = vunpack.c.l.b16 %v86
    %v311 = vunpack.c.l.b16 %v87
    %v312 = vunpack.c.l.b16 %v88
    %v313 = vunpack.c.l.b16 %v89
    %v314 = vunpack.c.l.b16 %v90
    %v315 = vunpack.c.l.b16 %v91
    %v316 = vunpack.c.l.b16 %v92
    %v317 = vunpack.c.l.b16 %v93
    %v318 = vunpack.c.l.b16 %v94
    %v319 = vunpack.c.l.b16 %v95
    %v320 = vunpack.c.l.b16 %v96
    %v321 = vunpack.c.l.b16 %v97
    %v322 = vunpack.c.l.b16 %v98
    %v323 = vunpack.c.l.b16 %v99
    %v324 = vunpack.c.l.b16 %v100
    %v325 = vunpack.c.l.b16 %v101
    %v326 = vunpack.c.l.b16 %v102
    %v327 = vunpack.c.l.b16 %v103
    %v328 = vunpack.c.l.b16 %v104
    %v329 = vunpack.c.l.b16 %v105
    %v330 = vunpack.c.l.b16 %v106
    %v331 = vunpack.c.l.b16 %v107
    %v332 = vunpack.c.l.b16 %v108
    %v333 = vunpack.c.l.b16 %v109
    %v334 = vunpack.c.l.b16 %v110
    %v335 = vunpack.c.l.b16 %v111
    %v336 = vunpack.c.l.b16 %v112
    %v337 = vunpack.c.l.b16 %v113
    %v338 = vunpack.c.l.b16 %v114
    %v339 = vunpack.c.l.b16 %v115
    %v340 = vunpack.c.l.b16 %v116
    %v341 = vunpack.c.l.b16 %v117
    %v342 = vunpack.c.l.b16 %v118
    %v343 = vunpack.c.l.b16 %v119
    %v344 = vunpack.c.l.b16 %v120
    %v345 = vunpack.c.l.b16 %v121
    %v346 = vunpack.c.l.b16 %v122
    %v347 = vunpack.c.l.b16 %v123
    %v348 = vunpack.c.l.b16 %v124
    %v349 = vunpack.c.l.b16 %v125
    %v350 = vunpack.c.l.b16 %v126
    %v351 = vunpack.c.l.b16 %v127
    %v352 = vunpack.c.l.b16 %v128
    %v353 = vunpack.c.l.b16 %v129
    %v354 = vunpack.c.l.b16 %v130
    %v355 = vunpack.c.l.b16 %v131
    %v356 = vunpack.c.l.b16 %v132
    %v357 = vunpack.c.l.b16 %v133
    %v358 = vunpack.c.l.b16 %v134
    %v359 = vunpack.c.l.b16 %v135
    %v360 = vpack.c.b16 %v263, %v262
    %v361 = vpack.c.b16 %v265, %v264
    %v362 = vpack.c.b16 %v267, %v266
    %v363 = vpack.c.b16 %v269, %v268
    %v364 = vpack.c.b16 %v271, %v270
    %v365 = vpack.c.b16 %v273, %v272
    %v366 = vpack.c.b16 %v275, %v274
    %v367 = vpack.c.b16 %v277, %v276
    %v368 = vpack.c.b16 %v279, %v278
    %v369 = vpack.c.b16 %v281, %v280
    %v370 = vpack.c.b16 %v283, %v282
    %v371 = vpack.c.b16 %v285, %v284
    %v372 = vpack.c.b16 %v287, %v286
    %v373 = vpack.c.b16 %v289, %v288
    %v374 = vpack.c.b16 %v291, %v290
    %v375 = vpack.c.b16 %v293, %v292
    %v376 = vpack.c.b16 %v295, %v294
    %v377 = vpack.c.b16 %v297, %v296
    %v378 = vpack.c.b16 %v299, %v298
    %v379 = vpack.c.b16 %v301, %v300
    %v380 = vpack.c.b16 %v303, %v302
    %v381 = vpack.c.b16 %v305, %v304
    %v382 = vpack.c.b16 %v307, %v306
    %v383 = vpack.c.b16 %v309, %v308
    %v384 = vpack.c.b16 %v311, %v310
    %v385 = vpack.c.b16 %v313, %v312
    %v386 = vpack.c.b16 %v315, %v314
    %v387 = vpack.c.b16 %v317, %v316
    %v388 = vpack.c.b16 %v319, %v318
    %v389 = vpack.c.b16 %v321, %v320
    %v390 = vpack.c.b16 %v323, %v322
    %v391 = vpack.c.b16 %v325, %v324
    %v392 = vpack.c.b16 %v327, %v326
    %v393 = vpack.c.b16 %v329, %v328
    %v394 = vpack.c.b16 %v331, %v330
    %v395 = vpack.c.b16 %v333, %v332
    %v396 = vpack.c.b16 %v335, %v334
    %v397 = vpack.c.b16 %v337, %v336
    %v398 = vpack.c.b16 %v339, %v338
    %v399 = vpack.c.b16 %v341, %v340
    %v400 = vpack.c.b16 %v343, %v342
    %v401 = vpack.c.b16 %v345, %v344
    %v402 = vpack.c.b16 %v347, %v346
    %v403 = vpack.c.b16 %v349, %v348
    %v404 = vpack.c.b16 %v351, %v350
    %v405 = vpack.c.b16 %v353, %v352
    %v406 = vpack.c.b16 %v355, %v354
    %v407 = vpack.c.b16 %v357, %v356
    %v408 = vpack.c.b16 %v359, %v358
    %vm458 = vcmask 130048
    %v460 = vsel %vm458, %v157, 0
    %462 = vmatpush.bf16.msra.mxu0 %v367
    %463 = vmatpush.bf16.msra.mxu0 %v366
    %464 = vmatpush.bf16.msra.mxu0 %v365
    %465 = vmatpush.bf16.msra.mxu0 %v364
    %466 = vmatpush.bf16.msra.mxu0 %v363
    %467 = vmatpush.bf16.msra.mxu0 %v362
    %468 = vmatpush.bf16.msra.mxu0 %v361
    %469 = vmatpush.bf16.msra.mxu0 %v360
    %470 = vmatmul.bf16.gmra.mxu0 %v151
    %v471 = vpop.f32.mrf.mxu0
    %v472 = vadd.f32 %v138, %v471
    %v473 = vpop.f32.mrf.mxu0
    %474 = vdwg.mxu0
    %475 = vmatpush.bf16.msra.mxu0 %v375
    %476 = vmatpush.bf16.msra.mxu0 %v374
    %477 = vmatpush.bf16.msra.mxu0 %v373
    %478 = vmatpush.bf16.msra.mxu0 %v372
    %479 = vmatpush.bf16.msra.mxu0 %v371
    %480 = vmatpush.bf16.msra.mxu0 %v370
    %481 = vmatpush.bf16.msra.mxu0 %v369
    %482 = vmatpush.bf16.msra.mxu0 %v368
    %483 = vmatmul.bf16.gmra.mxu0 %v152
    %v484 = vpop.f32.mrf.mxu0
    %v485 = vadd.f32 %v472, %v484
    %v486 = vpop.f32.mrf.mxu0
    %487 = vdwg.mxu0
    %488 = vmatpush.bf16.msra.mxu0 %v383
    %489 = vmatpush.bf16.msra.mxu0 %v382
    %490 = vmatpush.bf16.msra.mxu0 %v381
    %491 = vmatpush.bf16.msra.mxu0 %v380
    %492 = vmatpush.bf16.msra.mxu0 %v379
    %493 = vmatpush.bf16.msra.mxu0 %v378
    %494 = vmatpush.bf16.msra.mxu0 %v377
    %495 = vmatpush.bf16.msra.mxu0 %v376
    %496 = vmatmul.bf16.gmra.mxu0 %v153
    %v497 = vpop.f32.mrf.mxu0
    %v498 = vadd.f32 %v485, %v497
    %v499 = vpop.f32.mrf.mxu0
    %500 = vdwg.mxu0
    %501 = vmatpush.bf16.msra.mxu0 %v391
    %502 = vmatpush.bf16.msra.mxu0 %v390
    %503 = vmatpush.bf16.msra.mxu0 %v389
    %504 = vmatpush.bf16.msra.mxu0 %v388
    %505 = vmatpush.bf16.msra.mxu0 %v387
    %506 = vmatpush.bf16.msra.mxu0 %v386
    %507 = vmatpush.bf16.msra.mxu0 %v385
    %508 = vmatpush.bf16.msra.mxu0 %v384
    %509 = vmatmul.bf16.gmra.mxu0 %v154
    %v510 = vpop.f32.mrf.mxu0
    %v511 = vadd.f32 %v498, %v510
    %v512 = vpop.f32.mrf.mxu0
    %513 = vdwg.mxu0
    %514 = vmatpush.bf16.msra.mxu0 %v399
    %515 = vmatpush.bf16.msra.mxu0 %v398
    %516 = vmatpush.bf16.msra.mxu0 %v397
    %517 = vmatpush.bf16.msra.mxu0 %v396
    %518 = vmatpush.bf16.msra.mxu0 %v395
    %519 = vmatpush.bf16.msra.mxu0 %v394
    %520 = vmatpush.bf16.msra.mxu0 %v393
    %521 = vmatpush.bf16.msra.mxu0 %v392
    %522 = vmatmul.bf16.gmra.mxu0 %v155
    %v523 = vpop.f32.mrf.mxu0
    %v524 = vadd.f32 %v511, %v523
    %v525 = vpop.f32.mrf.mxu0
    %526 = vdwg.mxu0
    %527 = vmatpush.bf16.msra.mxu0 %v407
    %528 = vmatpush.bf16.msra.mxu0 %v406
    %529 = vmatpush.bf16.msra.mxu0 %v405
    %530 = vmatpush.bf16.msra.mxu0 %v404
    %531 = vmatpush.bf16.msra.mxu0 %v403
    %532 = vmatpush.bf16.msra.mxu0 %v402
    %533 = vmatpush.bf16.msra.mxu0 %v401
    %534 = vmatpush.bf16.msra.mxu0 %v400
    %535 = vmatmul.bf16.gmra.mxu0 %v156
    %v536 = vpop.f32.mrf.mxu0
    %v537 = vadd.f32 %v524, %v536
    %v538 = vpop.f32.mrf.mxu0
    %539 = vdwg.mxu0
    %540 = vmatpush.bf16.msra.mxu0 0
    %541 = vmatpush.bf16.msra.mxu0 0
    %542 = vmatpush.bf16.msra.mxu0 0
    %543 = vmatpush.bf16.msra.mxu0 0
    %544 = vmatpush.bf16.msra.mxu0 0
    %545 = vmatpush.bf16.msra.mxu0 0
    %546 = vmatpush.bf16.msra.mxu0 0
    %547 = vmatpush.bf16.msra.mxu0 %v408
    %548 = vmatmul.bf16.gmra.mxu0 %v460
    %v549 = vpop.f32.mrf.mxu0
    %v550 = vadd.f32 %v537, %v549
    %v551 = vpop.f32.mrf.mxu0
    %552 = vdwg.mxu0
    %v553 = vld [vmem:[%s3] sm:$0xf]
    %v554 = vld [vmem:[%s3 + $0x4] sm:$0xf]
    %v555 = vld [vmem:[%s3 + $0x8] sm:$0xf]
    %v556 = vld [vmem:[%s3 + $0xc] sm:$0xf]
    %v557 = vld [vmem:[%s3 + $0x10] sm:$0xf]
    %v558 = vld [vmem:[%s3 + $0x14] sm:$0xf]
    %v559 = vld [vmem:[%s3 + $0x18] sm:$0xf]
    %v560 = vld [vmem:[%s3 + $0x1c] sm:$0xf]
    %v561 = vld [vmem:[%s4] sm:$0x1]
    %v563 = vperm.slane %v561, 0
    %v573 = vunpack.c.l.b16 %v553
    %v574 = vunpack.c.l.b16 %v554
    %v575 = vunpack.c.l.b16 %v555
    %v576 = vunpack.c.l.b16 %v556
    %v577 = vunpack.c.l.b16 %v557
    %v578 = vunpack.c.l.b16 %v558
    %v579 = vunpack.c.l.b16 %v559
    %v580 = vunpack.c.l.b16 %v560
    %v581 = vpack.c.b16 %v574, %v573
    %v582 = vpack.c.b16 %v576, %v575
    %v583 = vpack.c.b16 %v578, %v577
    %v584 = vpack.c.b16 %v580, %v579
    %vm589 = vcmask 523264
    %v591 = vsel %vm589, %v550, 0
    %593 = vmatpush.bf16.msra.mxu0 0
    %594 = vmatpush.bf16.msra.mxu0 0
    %595 = vmatpush.bf16.msra.mxu0 0
    %596 = vmatpush.bf16.msra.mxu0 0
    %597 = vmatpush.bf16.msra.mxu0 %v584
    %598 = vmatpush.bf16.msra.mxu0 %v583
    %599 = vmatpush.bf16.msra.mxu0 %v582
    %600 = vmatpush.bf16.msra.mxu0 %v581
    %601 = vmatmul.f32.gmra.mxu0 %v591
    %v602 = vpop.f32.mrf.mxu0
    %v603 = vadd.f32 %v563, %v602
    %604 = vdwg.mxu0
    %v605 = vld [vmem:[%s5] sm:$0xf]
    %v606 = vld [vmem:[%s5 + $0x4] sm:$0xf]
    %v607 = vld [vmem:[%s5 + $0x8] sm:$0xf]
    %v608 = vld [vmem:[%s5 + $0xc] sm:$0xf]
    %v609 = vld [vmem:[%s6] sm:$0x1]
    %v611 = vperm.slane %v609, 0
    %v617 = vunpack.c.l.b16 %v605
    %v618 = vunpack.c.l.b16 %v606
    %v619 = vunpack.c.l.b16 %v607
    %v620 = vunpack.c.l.b16 %v608
    %v621 = vpack.c.b16 %v618, %v617
    %v622 = vpack.c.b16 %v620, %v619
    %vm625 = vcmask 261120
    %v627 = vsel %vm625, %v603, 0
    %629 = vmatpush.bf16.msra.mxu0 0
    %630 = vmatpush.bf16.msra.mxu0 0
    %631 = vmatpush.bf16.msra.mxu0 0
    %632 = vmatpush.bf16.msra.mxu0 0
    %633 = vmatpush.bf16.msra.mxu0 0
    %634 = vmatpush.bf16.msra.mxu0 0
    %635 = vmatpush.bf16.msra.mxu0 %v622
    %636 = vmatpush.bf16.msra.mxu0 %v621
    %637 = vmatmul.f32.gmra.mxu0 %v627
    %v638 = vpop.f32.mrf.mxu0
    %v639 = vadd.f32 %v611, %v638
    %640 = vdwg.mxu0
    %v641 = vld [vmem:[%s7] sm:$0xf]
    %v642 = vld [vmem:[%s7 + $0x4] sm:$0x1]
    %v643 = vld [vmem:[%s8] sm:$0x1]
    %v645 = vperm.slane %v643, 0
    %v649 = vunpack.c.l.b16 %v641
    %v650 = vunpack.c.l.b16 %v642
    %v651 = vpack.c.b16 %v650, %v649
    %vm652 = vcmask 80896
    %v654 = vsel %vm652, %v639, 0
    %vm656 = vcmask 1044480
    %v658 = vsel %vm656, %v651, 0
    %660 = vmatpush.bf16.msra.mxu0 0
    %661 = vmatpush.bf16.msra.mxu0 0
    %662 = vmatpush.bf16.msra.mxu0 0
    %663 = vmatpush.bf16.msra.mxu0 0
    %664 = vmatpush.bf16.msra.mxu0 0
    %665 = vmatpush.bf16.msra.mxu0 0
    %666 = vmatpush.bf16.msra.mxu0 0
    %667 = vmatpush.bf16.msra.mxu0 %v658
    %668 = vmatmul.f32.gmra.mxu0 %v654
    %v669 = vpop.f32.mrf.mxu0
    %v670 = vadd.f32 %v645, %v669
    %671 = vdwg.mxu0
    %672 = vst [vmem:[#allocation2] sm:$0xff] %v670
    // Predicated region
    $region38: #{tpu_custom_call.1} parent=1 // pred_check
      _
    $region39: #{tpu_custom_call.1} parent=1 // pred_check_branch
      %674 = sbr.rel (0) target = $region41
    $region40: #{tpu_custom_call.1} parent=1 // pred_region
      %676 = vsyncadd [#allocation3], 0
      %s678 = sshll.u32 [#allocation2], 4
      %s679 = int_to_ptr.vmem [resolvable:$true] %s678
      %s680 = sshll.u32 %s9, 4
      %s681 = int_to_ptr.hbm [resolvable:$true] %s680
      %683 = dma.vmem_to_hbm [thread:$0]  %s679, 128, %s681, [#allocation3]
    $region41: #{tpu_custom_call.1} parent=1 // pred_fallthru
      _
    // Predicated region
    $region42: #{tpu_custom_call.1} parent=1 // pred_check
      _
    $region43: #{tpu_custom_call.1} parent=1 // pred_check_branch
      %685 = sbr.rel (0) target = $region45
    $region44: #{tpu_custom_call.1} parent=1 // pred_region
      %687 = dma.done [#allocation3], 128
    $region45: #{tpu_custom_call.1} parent=1 // pred_fallthru
      _
    %688 = vsyncpa [#allocation3], 1

</llo_original>
